<compile_context>
chip_gen: v5e
topology: v5e:2x2
jax: 0.10.0
libtpu: 0.0.40
codegen_flags: <defaults>
</compile_context>

<pallas_src>
import functools

import jax
import jax.numpy as jnp
import numpy as np
from jax.experimental import pallas as pl
from jax.experimental.pallas import tpu as pltpu

EPS = 1e-5                       # torch.nn.InstanceNorm3d default eps
MXU_DTYPE = jnp.float32          # set jnp.bfloat16 on v6e/v7x (keep stats in f32)
VMEM_LIMIT = 48 * 1024 * 1024


# ----------------------------------------------------------------------------
# Kernel 1: ConvTranspose3d(k=2, s=2) matmul + InstanceNorm3d + ReLU (fused)
#   x block : (1, D*H, W*Cin)        (row = (d,h), col = (w, ci))
#   w_band  : (W*Cin, W*8*Cout2)     block-diagonal (kron(I_W, wmat)) -> lane-dense out
#   g / gt  : channel-grouping matrices used to reduce / broadcast per-channel stats
#             with small matmuls (no cross-lane reshapes inside the kernel).
#   Bias is intentionally dropped: InstanceNorm cancels a per-channel constant.
# ----------------------------------------------------------------------------
def _upconv_in_relu_kernel(inv_count, x_ref, w_ref, g_ref, gt_ref, o_ref):
    y = jnp.dot(x_ref[0], w_ref[...], preferred_element_type=jnp.float32)
    s1 = jnp.sum(y, axis=0, keepdims=True)                       # (1, W*K8)
    mean = jnp.dot(s1, g_ref[...],
                   preferred_element_type=jnp.float32) * inv_count   # (1, Cout2)
    mean_b = jnp.dot(mean, gt_ref[...], preferred_element_type=jnp.float32)
    yc = y - mean_b
    s2 = jnp.sum(yc * yc, axis=0, keepdims=True)
    var = jnp.dot(s2, g_ref[...],
                  preferred_element_type=jnp.float32) * inv_count
    inv_b = jnp.dot(jax.lax.rsqrt(var + EPS), gt_ref[...],
                    preferred_element_type=jnp.float32)
    o_ref[0] = jnp.maximum(yc * inv_b, 0.0)


def upconv_inorm_relu(x_cl, up_w):
    """x_cl: (N, D, H, W, Cin) channels-last.  Returns (N, 2D, 2H, 2W, Cout2)."""
    N, D, H, W, Cin = x_cl.shape
    Cout2 = up_w.shape[1]
    K8 = 8 * Cout2

    # (Cin, Cout2, 2,2,2) -> (Cin, 8*Cout2), column order (a, b, c, co)
    wmat = jnp.transpose(up_w, (0, 2, 3, 4, 1)).reshape(Cin, K8)
    w_band = jnp.kron(jnp.eye(W, dtype=jnp.float32), wmat)       # (W*Cin, W*K8)
    g = jnp.kron(jnp.ones((W * 8, 1), jnp.float32),
                 jnp.eye(Cout2, dtype=jnp.float32))               # (W*K8, Cout2)
    gt = g.T                                                      # (Cout2, W*K8)

    x1 = x_cl.reshape(N, D * H, W * Cin).astype(MXU_DTYPE)
    w_band = w_band.astype(MXU_DTYPE)
    inv_count = 1.0 / float(D * H * W * 8)    # elements per output channel

    out = pl.pallas_call(
        functools.partial(_upconv_in_relu_kernel, inv_count),
        grid=(N,),
        in_specs=[
            pl.BlockSpec((1, D * H, W * Cin), lambda n: (n, 0, 0)),
            pl.BlockSpec((W * Cin, W * K8), lambda n: (0, 0)),
            pl.BlockSpec((W * K8, Cout2), lambda n: (0, 0)),
            pl.BlockSpec((Cout2, W * K8), lambda n: (0, 0)),
        ],
        out_specs=pl.BlockSpec((1, D * H, W * K8), lambda n: (n, 0, 0)),
        out_shape=jax.ShapeDtypeStruct((N, D * H, W * K8), jnp.float32),
        compiler_params=pltpu.CompilerParams(
            dimension_semantics=("parallel",),
            vmem_limit_bytes=VMEM_LIMIT),
    )(x1, w_band, g, gt)

    # De-interleave the 8 taps: row (d,h), col (w,a,b,c,co) -> (N,2D,2H,2W,Cout2)
    y = out.reshape(N, D, H, W, 2, 2, 2, Cout2)
    y = jnp.transpose(y, (0, 1, 4, 2, 5, 3, 6, 7))
    return y.reshape(N, 2 * D, 2 * H, 2 * W, Cout2)


# ----------------------------------------------------------------------------
# Kernel 2 (pass 1 of LUConv): 5x5x5 conv on a depth-halo tile + per-channel
# sum / sum-of-squares accumulation across depth tiles (grid axis "arbitrary").
#   x block : (1, 1, Dt+4, Hp, Wp*C)   padded depth-halo tile (built once in HBM,
#                                       ~(Dt+4)/Dt duplication vs. 125x for im2col)
#   w block : (25, Wp*C, W*Cout)       banded per-(kd,kh) weights: the kw taps and
#                                       input channels are folded into K.
#   Conv bias dropped (cancelled by the following InstanceNorm).
# ----------------------------------------------------------------------------
def _conv_stats_kernel(Dt, H2, WCout, Cout, x_ref, w_ref, g_ref,
                       y_ref, s1_ref, s2_ref):
    td = pl.program_id(1)
    gs1 = jnp.zeros((1, Cout), jnp.float32)
    gs2 = jnp.zeros((1, Cout), jnp.float32)
    for d in range(Dt):
        acc = jnp.zeros((H2, WCout), jnp.float32)
        for kd in range(5):
            plane = x_ref[0, 0, d + kd]                       # (Hp, Wp*C)
            for kh in range(5):
                acc = acc + jnp.dot(plane[kh:kh + H2, :],
                                    w_ref[kd * 5 + kh],
                                    preferred_element_type=jnp.float32)
        y_ref[0, 0, d * H2:(d + 1) * H2, :] = acc
        gs1 = gs1 + jnp.dot(jnp.sum(acc, axis=0, keepdims=True), g_ref[...],
                            preferred_element_type=jnp.float32)
        gs2 = gs2 + jnp.dot(jnp.sum(acc * acc, axis=0, keepdims=True), g_ref[...],
                            preferred_element_type=jnp.float32)

    @pl.when(td == 0)
    def _():
        s1_ref[...] = jnp.zeros_like(s1_ref)
        s2_ref[...] = jnp.zeros_like(s2_ref)

    s1_ref[...] += gs1.reshape(1, 1, Cout)
    s2_ref[...] += gs2.reshape(1, 1, Cout)


# Pass 2: normalize + ReLU (optionally fused residual add + ReLU for the last layer)
def _norm_relu_kernel(inv_count, y_ref, s1_ref, s2_ref, gt_ref, o_ref):
    y = y_ref[0, 0]
    mean = s1_ref[0] * inv_count                              # (1, Cout)
    var = s2_ref[0] * inv_count - mean * mean
    mean_b = jnp.dot(mean, gt_ref[...], preferred_element_type=jnp.float32)
    inv_b = jnp.dot(jax.lax.rsqrt(var + EPS), gt_ref[...],
                    preferred_element_type=jnp.float32)
    o_ref[0, 0] = jnp.maximum((y - mean_b) * inv_b, 0.0)


def _norm_relu_residual_kernel(inv_count, y_ref, s1_ref, s2_ref, gt_ref,
                               res_ref, o_ref):
    y = y_ref[0, 0]
    mean = s1_ref[0] * inv_count
    var = s2_ref[0] * inv_count - mean * mean
    mean_b = jnp.dot(mean, gt_ref[...], preferred_element_type=jnp.float32)
    inv_b = jnp.dot(jax.lax.rsqrt(var + EPS), gt_ref[...],
                    preferred_element_type=jnp.float32)
    t = jnp.maximum((y - mean_b) * inv_b, 0.0)
    o_ref[0, 0] = jnp.maximum(t + res_ref[0, 0], 0.0)


def conv_inorm_relu_layer(h_cl, cw, residual=None, dt=None):
    """LUConv: Conv3d(5, pad=2) + InstanceNorm3d + ReLU (+ fused residual add+ReLU).

    h_cl: (N, D2, H2, W2, C) channels-last; cw: (5,5,5,C,Cout) DHWIO.
    """
    N, D2, H2, W2, C = h_cl.shape
    Cout = cw.shape[-1]
    Dt = dt if dt is not None else min(D2, 4)       # depth tile (size for VMEM)
    assert D2 % Dt == 0
    Td = D2 // Dt
    Dp, Hp, Wp = D2 + 4, H2 + 4, W2 + 4
    WpC, WCout, DtH = Wp * C, W2 * Cout, Dt * H2
    inv_count = 1.0 / float(D2 * H2 * W2)

    # Padded, depth-halo-tiled input (plain-JAX glue, built once).
    hp = jnp.pad(h_cl, ((0, 0), (2, 2), (2, 2), (2, 2), (0, 0)))
    hp = hp.reshape(N, Dp, Hp, WpC)
    tiles = jnp.stack([hp[:, t * Dt: t * Dt + Dt + 4] for t in range(Td)],
                      axis=1).astype(MXU_DTYPE)          # (N, Td, Dt+4, Hp, WpC)

    # Banded per-(kd,kh) weights: W25[kd*5+kh][(w+kw)*C+ci, w*Cout+co] = cw[kd,kh,kw,ci,co]
    # NOTE: zero-band waste grows with W2; for very large W2 switch to per-kw taps.
    bands = []
    for kd in range(5):
        for kh in range(5):
            m = jnp.zeros((WpC, WCout), jnp.float32)
            for kw in range(5):
                m = m + jnp.kron(jnp.eye(Wp, W2, k=-kw, dtype=jnp.float32),
                                 cw[kd, kh, kw])
            bands.append(m)
    w25 = jnp.stack(bands).astype(MXU_DTYPE)             # (25, WpC, WCout)

    g2 = jnp.kron(jnp.ones((W2, 1), jnp.float32),
                  jnp.eye(Cout, dtype=jnp.float32))       # (WCout, Cout)
    gt2 = g2.T                                            # (Cout, WCout)

    flops = int(2 * N * Td * Dt * 25 * H2 * WpC * WCout)
    bytes_accessed = int(4 * (tiles.size + w25.size + N * Td * DtH * WCout))

    # -------- pass 1: conv + stats accumulation (Td is the reduction axis) --------
    conv_raw, s1, s2 = pl.pallas_call(
        functools.partial(_conv_stats_kernel, Dt, H2, WCout, Cout),
        grid=(N, Td),
        in_specs=[
            pl.BlockSpec((1, 1, Dt + 4, Hp, WpC), lambda n, t: (n, t, 0, 0, 0)),
            pl.BlockSpec((25, WpC, WCout), lambda n, t: (0, 0, 0)),
            pl.BlockSpec((WCout, Cout), lambda n, t: (0, 0)),
        ],
        out_specs=(
            pl.BlockSpec((1, 1, DtH, WCout), lambda n, t: (n, t, 0, 0)),
            pl.BlockSpec((1, 1, Cout), lambda n, t: (n, 0, 0)),
            pl.BlockSpec((1, 1, Cout), lambda n, t: (n, 0, 0)),
        ),
        out_shape=(
            jax.ShapeDtypeStruct((N, Td, DtH, WCout), jnp.float32),
            jax.ShapeDtypeStruct((N, 1, Cout), jnp.float32),
            jax.ShapeDtypeStruct((N, 1, Cout), jnp.float32),
        ),
        compiler_params=pltpu.CompilerParams(
            dimension_semantics=("parallel", "arbitrary"),
            vmem_limit_bytes=VMEM_LIMIT),
        cost_estimate=pl.CostEstimate(flops=flops, transcendentals=0,
                                      bytes_accessed=bytes_accessed),
    )(tiles, w25, g2)

    # -------- pass 2: normalize + ReLU (+ fused residual add + ReLU) --------------
    norm_inputs = [conv_raw, s1, s2, gt2]
    in_specs = [
        pl.BlockSpec((1, 1, DtH, WCout), lambda n, t: (n, t, 0, 0)),
        pl.BlockSpec((1, 1, Cout), lambda n, t: (n, 0, 0)),
        pl.BlockSpec((1, 1, Cout), lambda n, t: (n, 0, 0)),
        pl.BlockSpec((Cout, WCout), lambda n, t: (0, 0)),
    ]
    if residual is None:
        kern = functools.partial(_norm_relu_kernel, inv_count)
    else:
        kern = functools.partial(_norm_relu_residual_kernel, inv_count)
        norm_inputs.append(residual.reshape(N, Td, DtH, WCout))
        in_specs.append(pl.BlockSpec((1, 1, DtH, WCout), lambda n, t: (n, t, 0, 0)))

    out = pl.pallas_call(
        kern,
        grid=(N, Td),
        in_specs=in_specs,
        out_specs=pl.BlockSpec((1, 1, DtH, WCout), lambda n, t: (n, t, 0, 0)),
        out_shape=jax.ShapeDtypeStruct((N, Td, DtH, WCout), jnp.float32),
        compiler_params=pltpu.CompilerParams(
            dimension_semantics=("parallel", "parallel"),
            vmem_limit_bytes=VMEM_LIMIT),
    )(*norm_inputs)

    return out.reshape(N, D2, H2, W2, Cout)


# ------------------------------ full forward --------------------------------

def up_transition_forward(x, skipx, params):
    """x: (N, Cin, D, H, W), skipx: (N, Cout//2, 2D, 2H, 2W)  (PyTorch NCDHW).
    Returns (N, Cout, 2D, 2H, 2W)."""
    # TODO(synk): Dropout3d path (dropout=True) not implemented (module uses False).
    x_cl = jnp.transpose(x, (0, 2, 3, 4, 1)).astype(jnp.float32)
    skip_cl = jnp.transpose(skipx, (0, 2, 3, 4, 1)).astype(jnp.float32)

    # ConvTranspose3d + InstanceNorm + ReLU (bias dropped: cancelled by the norm)
    up = upconv_inorm_relu(x_cl, params["up_w"])          # (N, 2D, 2H, 2W, Cout2)
    xcat = jnp.concatenate([up, skip_cl], axis=-1)         # (N, 2D, 2H, 2W, Cout)

    h = xcat
    n_conv = len(params["convs"])
    for i, (cw, _cb) in enumerate(params["convs"]):        # _cb unused: bias cancelled
        res = xcat if i == n_conv - 1 else None            # fuse final add+ReLU
        h = conv_inorm_relu_layer(h, cw, residual=res)

    return jnp.transpose(h, (0, 4, 1, 2, 3))               # back to NCDHW


# ----------------------------- pure-JAX reference ---------------------------

def _inorm_relu_ref(x_cl):
    mean = jnp.mean(x_cl, axis=(1, 2, 3), keepdims=True)
    var = jnp.mean((x_cl - mean) ** 2, axis=(1, 2, 3), keepdims=True)
    return jnp.maximum((x_cl - mean) * jax.lax.rsqrt(var + EPS), 0.0)


def reference_forward(x, skipx, params):
    x_cl = jnp.transpose(x, (0, 2, 3, 4, 1)).astype(jnp.float32)
    skip_cl = jnp.transpose(skipx, (0, 2, 3, 4, 1)).astype(jnp.float32)
    N, D, H, W, _ = x_cl.shape
    wt, bt = params["up_w"], params["up_b"]
    Cout2 = wt.shape[1]

    y = jnp.einsum('ndhwi,ioabc->ndahbwco', x_cl, wt)
    y = y.reshape(N, 2 * D, 2 * H, 2 * W, Cout2) + bt      # bias kept in reference
    y = _inorm_relu_ref(y)

    xcat = jnp.concatenate([y, skip_cl], axis=-1)
    h = xcat
    for (cw, cb) in params["convs"]:
        h = jax.lax.conv_general_dilated(
            h, cw, window_strides=(1, 1, 1), padding='SAME',
            dimension_numbers=('NDHWC', 'DHWIO', 'NDHWC')) + cb
        h = _inorm_relu_ref(h)
    out = jnp.maximum(h + xcat, 0.0)
    return jnp.transpose(out, (0, 4, 1, 2, 3))


# ----------------------------------- main -----------------------------------

if __name__ == "__main__":
    key = jax.random.PRNGKey(0)
    N, Cin, Cout, D, H, W = 2, 8, 8, 4, 4, 4          # UpTransition(8, 8, n_conv=2)
    n_conv = 2
    Cout2 = Cout // 2

    keys = jax.random.split(key, 6 + n_conv)
    x = jax.random.normal(keys[0], (N, Cin, D, H, W), jnp.float32)
    skipx = jax.random.normal(keys[1], (N, Cout2, 2 * D, 2 * H, 2 * W), jnp.float32)

    up_w = jax.random.normal(keys[2], (Cin, Cout2, 2, 2, 2), jnp.float32) * (1.0 / np.sqrt(Cin * 8))
    up_b = jax.random.normal(keys[3], (Cout2,), jnp.float32) * 0.1
    convs = []
    for i in range(n_conv):
        kw_, kb_ = jax.random.split(keys[4 + i])
        # torch Conv3d weight (Cout, Cin, 5,5,5) -> DHWIO (5,5,5,Cin,Cout)
        cw_torch = jax.random.normal(kw_, (Cout, Cout, 5, 5, 5), jnp.float32) * (1.0 / np.sqrt(Cout * 125))
        cw = jnp.transpose(cw_torch, (2, 3, 4, 1, 0))
        cb = jax.random.normal(kb_, (Cout,), jnp.float32) * 0.1
        convs.append((cw, cb))
    params = {"up_w": up_w, "up_b": up_b, "convs": convs}

    out = up_transition_forward(x, skipx, params)
    out = jax.block_until_ready(out)

    ref = reference_forward(x, skipx, params)
    np.testing.assert_allclose(np.asarray(out), np.asarray(ref), rtol=1e-3, atol=1e-3)
    assert out.shape == (N, Cout, 2 * D, 2 * H, 2 * W)

    print("KERNEL_OK")
</pallas_src>

<mosaic_0001>
module attributes {stable_mosaic.version = 11 : i64} {
  func.func @_upconv_in_relu_kernel(%arg0: i32, %arg1: memref<1x16x32xf32, #tpu.memory_space<vmem>>, %arg2: memref<32x128xf32, #tpu.memory_space<vmem>>, %arg3: memref<128x4xf32, #tpu.memory_space<vmem>>, %arg4: memref<4x128xf32, #tpu.memory_space<vmem>>, %arg5: memref<1x16x128xf32, #tpu.memory_space<vmem>>) attributes {dimension_semantics = [#tpu.dimension_semantics<parallel>], iteration_bounds = array<i64: 2>, scalar_prefetch = 0 : i64, scratch_operands = 0 : i64, tpu.core_type = #tpu.core_type<tc>, window_params = [{transform_indices = @transform_0, window_bounds = array<i64: 1, 16, 32>}, {pipeline_mode = #tpu.pipeline_mode<synchronous>, transform_indices = @transform_1, window_bounds = array<i64: 32, 128>}, {pipeline_mode = #tpu.pipeline_mode<synchronous>, transform_indices = @transform_2, window_bounds = array<i64: 128, 4>}, {pipeline_mode = #tpu.pipeline_mode<synchronous>, transform_indices = @transform_3, window_bounds = array<i64: 4, 128>}, {transform_indices = @transform_4, window_bounds = array<i64: 1, 16, 128>}]} {
    %c0 = arith.constant 0 : index
    %c0_0 = arith.constant 0 : index
    %c0_1 = arith.constant 0 : index
    %0 = vector.load %arg1[%c0, %c0_0, %c0_1] : memref<1x16x32xf32, #tpu.memory_space<vmem>>, vector<1x16x32xf32>
    %1 = vector.shape_cast %0 : vector<1x16x32xf32> to vector<16x32xf32>
    %c0_2 = arith.constant 0 : index
    %c0_3 = arith.constant 0 : index
    %2 = vector.load %arg2[%c0_2, %c0_3] : memref<32x128xf32, #tpu.memory_space<vmem>>, vector<32x128xf32>
    %cst = arith.constant dense<0.000000e+00> : vector<16x128xf32>
    %3 = tpu.matmul %1, %2, %cst {dimension_numbers = #tpu.dot_dimension_numbers<[1], [0], [0], [1], [0, 0, 1, 1], [], []>} : vector<16x32xf32>, vector<32x128xf32>, vector<16x128xf32> -> vector<16x128xf32>
    %cst_4 = arith.constant dense<0.000000e+00> : vector<128xf32>
    %4 = vector.multi_reduction <add>, %3, %cst_4 [0] : vector<16x128xf32> to vector<128xf32>
    %5 = vector.shape_cast %4 : vector<128xf32> to vector<1x128xf32>
    %c0_5 = arith.constant 0 : index
    %c0_6 = arith.constant 0 : index
    %6 = vector.load %arg3[%c0_5, %c0_6] : memref<128x4xf32, #tpu.memory_space<vmem>>, vector<128x4xf32>
    %cst_7 = arith.constant dense<0.000000e+00> : vector<1x4xf32>
    %7 = tpu.matmul %5, %6, %cst_7 {dimension_numbers = #tpu.dot_dimension_numbers<[1], [0], [0], [1], [0, 0, 1, 1], [], []>} : vector<1x128xf32>, vector<128x4xf32>, vector<1x4xf32> -> vector<1x4xf32>
    %cst_8 = arith.constant 0.001953125 : f32
    %8 = vector.broadcast %cst_8 : f32 to vector<1x4xf32>
    %9 = arith.mulf %7, %8 : vector<1x4xf32>
    %c0_9 = arith.constant 0 : index
    %c0_10 = arith.constant 0 : index
    %10 = vector.load %arg4[%c0_9, %c0_10] : memref<4x128xf32, #tpu.memory_space<vmem>>, vector<4x128xf32>
    %cst_11 = arith.constant dense<0.000000e+00> : vector<1x128xf32>
    %11 = tpu.matmul %9, %10, %cst_11 {dimension_numbers = #tpu.dot_dimension_numbers<[1], [0], [0], [1], [0, 0, 1, 1], [], []>} : vector<1x4xf32>, vector<4x128xf32>, vector<1x128xf32> -> vector<1x128xf32>
    %12 = vector.broadcast %11 : vector<1x128xf32> to vector<16x128xf32>
    %13 = arith.subf %3, %12 : vector<16x128xf32>
    %14 = arith.mulf %13, %13 : vector<16x128xf32>
    %cst_12 = arith.constant dense<0.000000e+00> : vector<128xf32>
    %15 = vector.multi_reduction <add>, %14, %cst_12 [0] : vector<16x128xf32> to vector<128xf32>
    %16 = vector.shape_cast %15 : vector<128xf32> to vector<1x128xf32>
    %c0_13 = arith.constant 0 : index
    %c0_14 = arith.constant 0 : index
    %17 = vector.load %arg3[%c0_13, %c0_14] : memref<128x4xf32, #tpu.memory_space<vmem>>, vector<128x4xf32>
    %cst_15 = arith.constant dense<0.000000e+00> : vector<1x4xf32>
    %18 = tpu.matmul %16, %17, %cst_15 {dimension_numbers = #tpu.dot_dimension_numbers<[1], [0], [0], [1], [0, 0, 1, 1], [], []>} : vector<1x128xf32>, vector<128x4xf32>, vector<1x4xf32> -> vector<1x4xf32>
    %cst_16 = arith.constant 0.001953125 : f32
    %19 = vector.broadcast %cst_16 : f32 to vector<1x4xf32>
    %20 = arith.mulf %18, %19 : vector<1x4xf32>
    %cst_17 = arith.constant 9.99999974E-6 : f32
    %21 = vector.broadcast %cst_17 : f32 to vector<1x4xf32>
    %22 = arith.addf %20, %21 : vector<1x4xf32>
    %23 = math.rsqrt %22 : vector<1x4xf32>
    %c0_18 = arith.constant 0 : index
    %c0_19 = arith.constant 0 : index
    %24 = vector.load %arg4[%c0_18, %c0_19] : memref<4x128xf32, #tpu.memory_space<vmem>>, vector<4x128xf32>
    %cst_20 = arith.constant dense<0.000000e+00> : vector<1x128xf32>
    %25 = tpu.matmul %23, %24, %cst_20 {dimension_numbers = #tpu.dot_dimension_numbers<[1], [0], [0], [1], [0, 0, 1, 1], [], []>} : vector<1x4xf32>, vector<4x128xf32>, vector<1x128xf32> -> vector<1x128xf32>
    %26 = vector.broadcast %25 : vector<1x128xf32> to vector<16x128xf32>
    %27 = arith.mulf %13, %26 : vector<16x128xf32>
    %cst_21 = arith.constant 0.000000e+00 : f32
    %28 = vector.broadcast %cst_21 : f32 to vector<16x128xf32>
    %29 = arith.maximumf %27, %28 : vector<16x128xf32>
    %c0_22 = arith.constant 0 : index
    %c0_23 = arith.constant 0 : index
    %c0_24 = arith.constant 0 : index
    %30 = vector.load %arg5[%c0_22, %c0_23, %c0_24] : memref<1x16x128xf32, #tpu.memory_space<vmem>>, vector<1x16x128xf32>
    %31 = vector.shape_cast %30 : vector<1x16x128xf32> to vector<16x128xf32>
    %32 = vector.shape_cast %29 : vector<16x128xf32> to vector<1x16x128xf32>
    tpu.vector_store %arg5[%c0_22, %c0_23, %c0_24], %32 {strides = array<i32>} : memref<1x16x128xf32, #tpu.memory_space<vmem>>, vector<1x16x128xf32>,
    return
  }
  func.func @transform_0(%arg0: i32) -> (i32, i32, i32) {
    %c0_i32 = arith.constant 0 : i32
    %c0_i32_0 = arith.constant 0 : i32
    %c0_i32_1 = arith.constant 0 : i32
    return %arg0, %c0_i32, %c0_i32_0 : i32, i32, i32
  }
  func.func @transform_1(%arg0: i32) -> (i32, i32) {
    %c0_i32 = arith.constant 0 : i32
    %c0_i32_0 = arith.constant 0 : i32
    %c0_i32_1 = arith.constant 0 : i32
    return %c0_i32, %c0_i32_0 : i32, i32
  }
  func.func @transform_2(%arg0: i32) -> (i32, i32) {
    %c0_i32 = arith.constant 0 : i32
    %c0_i32_0 = arith.constant 0 : i32
    %c0_i32_1 = arith.constant 0 : i32
    return %c0_i32, %c0_i32_0 : i32, i32
  }
  func.func @transform_3(%arg0: i32) -> (i32, i32) {
    %c0_i32 = arith.constant 0 : i32
    %c0_i32_0 = arith.constant 0 : i32
    %c0_i32_1 = arith.constant 0 : i32
    return %c0_i32, %c0_i32_0 : i32, i32
  }
  func.func @transform_4(%arg0: i32) -> (i32, i32, i32) {
    %c0_i32 = arith.constant 0 : i32
    %c0_i32_0 = arith.constant 0 : i32
    %c0_i32_1 = arith.constant 0 : i32
    return %arg0, %c0_i32, %c0_i32_0 : i32, i32, i32
  }
}

</mosaic_0001>

<llo_original>
// kernel: tpu_custom_call.1
$region0: #{tpu_custom_call.1}
  #allocation0 [shape = 'u32[]', space=smem, size = 0x4, offset = 0x4, fixed_abs, tag = 'smem constant byte address 0x4 - core index']
  #allocation1 [shape = 'u32[72,128]{1,0:T(1,128)}', space=vmem, size = 0x9000, scoped, tag = 'internal scratch']
  %s0 = inlined_call_operand.vmem [shape: f32[2,16,32], index: 0, kind: input, shape index: {}]
  %s1 = inlined_call_operand.vmem [shape: f32[32,128], index: 1, kind: input, shape index: {}]
  %s2 = inlined_call_operand.vmem [shape: f32[128,4], index: 2, kind: input, shape index: {}]
  %s3 = inlined_call_operand.vmem [shape: f32[4,128], index: 3, kind: input, shape index: {}]
  %s4 = inlined_call_operand.hbm [shape: f32[2,16,128], index: 4, kind: output, shape index: {}]
  %s5 = sld [smem:[#allocation0]]
  $region49: #{tpu_custom_call.1} parent=0
    _
  %s7 = ssub.s32 1, %s5
  %s8 = scalar_select 0, %s7, %s5
  $region1: #{tpu_custom_call.1} parent=0
    #allocation2 [shape = 'u8[16384]{0}', space=vmem, size = 0x4000, scoped, tag = 'output window, operand 0']
    #allocation3 [shape = 's32[2]{0}', space=sflag, size = 0x8, scoped, tag = 'scoped memory for tpu_custom_call.1']
    %9 = vsyncpa [#allocation3], 0
    %s10 = scalar_lea.sflag [#allocation3], 1
    %11 = vsyncpa %s10, 0
    loop: start=0, step=1, limit=4
    $region2: #{tpu_custom_call.1} parent=1 // loop_pre_header
      _
    $region3: #{tpu_custom_call.1} parent=1 // loop_header
      %s13 = sphi 0, %s17
      %p14 = scmp.ge.s32.totalorder %s13, 4
      %s23 = sphi 0, %s25
      %s26 = sphi 0, %s23
      %s27 = sphi 0, %s26
      %s43 = sphi 0, %s27
      %s47 = sphi 0, %s47
      %s49 = sphi 0, %s47
      %s50 = sphi 0, %s49
      %s64 = sphi 0, %s50
      %s68 = sphi 0, %s68
      %s70 = sphi 0, %s68
      %s71 = sphi 0, %s70
      %s85 = sphi 0, %s71
      %s89 = sphi 0, %s89
      %s91 = sphi 0, %s89
      %s92 = sphi 0, %s91
      %s106 = sphi 0, %s92
      %s112 = sphi 0, %s114
      %s115 = sphi 0, %s112
      %s116 = sphi 0, %s115
      %s132 = sphi 0, %s116
    $region4: #{tpu_custom_call.1} parent=1 // loop_header_branch
      %16 = sbr.rel (%p14) target = $region8
    $region5: #{tpu_custom_call.1} parent=1 // loop_body
      %s18 = ssub.s32 %s13, 1
      %s19 = ssub.s32 %s13, 2
      %s20 = sadd.s32 %s13, 1
      %s21 = ssub.s32 %s13, %s20
      %p22 = scmp.eq.s32.totalorder %s21, 0
      %s24 = sadd.s32 %s23, 1
      %s25 = scalar_select %p22, %s23, %s24
      %p28 = pneg %p22
      %p29 = scmp.eq.s32.totalorder %s13, 1
      %p30 = por %p28, %p29
      %p31 = scmp.ne.s32.totalorder %s23, %s26
      %p32 = scmp.eq.s32.totalorder %s13, 0
      %p33 = por %p31, %p32
      %p34 = scmp.ne.s32.totalorder %s23, %s26
      %p35 = scmp.eq.s32.totalorder %s18, 1
      %p36 = por %p34, %p35
      %p37 = scmp.ne.s32.totalorder %s26, %s27
      %p38 = scmp.eq.s32.totalorder %s18, 0
      %p39 = por %p37, %p38
      %p40 = scmp.ne.s32.totalorder %s26, %s27
      %p41 = scmp.eq.s32.totalorder %s19, 1
      %p42 = por %p40, %p41
      %p44 = scmp.ne.s32.totalorder %s27, %s43
      %p45 = scmp.eq.s32.totalorder %s19, 0
      %p46 = por %p44, %p45
      %s48 = sadd.s32 %s47, 1
      %p51 = scmp.eq.s32.totalorder %s13, 1
      %p52 = scmp.ne.s32.totalorder %s47, %s49
      %p53 = scmp.eq.s32.totalorder %s13, 0
      %p54 = por %p52, %p53
      %p55 = scmp.ne.s32.totalorder %s47, %s49
      %p56 = scmp.eq.s32.totalorder %s18, 1
      %p57 = por %p55, %p56
      %p58 = scmp.ne.s32.totalorder %s49, %s50
      %p59 = scmp.eq.s32.totalorder %s18, 0
      %p60 = por %p58, %p59
      %p61 = scmp.ne.s32.totalorder %s49, %s50
      %p62 = scmp.eq.s32.totalorder %s19, 1
      %p63 = por %p61, %p62
      %p65 = scmp.ne.s32.totalorder %s50, %s64
      %p66 = scmp.eq.s32.totalorder %s19, 0
      %p67 = por %p65, %p66
      %s69 = sadd.s32 %s68, 1
      %p72 = scmp.eq.s32.totalorder %s13, 1
      %p73 = scmp.ne.s32.totalorder %s68, %s70
      %p74 = scmp.eq.s32.totalorder %s13, 0
      %p75 = por %p73, %p74
      %p76 = scmp.ne.s32.totalorder %s68, %s70
      %p77 = scmp.eq.s32.totalorder %s18, 1
      %p78 = por %p76, %p77
      %p79 = scmp.ne.s32.totalorder %s70, %s71
      %p80 = scmp.eq.s32.totalorder %s18, 0
      %p81 = por %p79, %p80
      %p82 = scmp.ne.s32.totalorder %s70, %s71
      %p83 = scmp.eq.s32.totalorder %s19, 1
      %p84 = por %p82, %p83
      %p86 = scmp.ne.s32.totalorder %s71, %s85
      %p87 = scmp.eq.s32.totalorder %s19, 0
      %p88 = por %p86, %p87
      %s90 = sadd.s32 %s89, 1
      %p93 = scmp.eq.s32.totalorder %s13, 1
      %p94 = scmp.ne.s32.totalorder %s89, %s91
      %p95 = scmp.eq.s32.totalorder %s13, 0
      %p96 = por %p94, %p95
      %p97 = scmp.ne.s32.totalorder %s89, %s91
      %p98 = scmp.eq.s32.totalorder %s18, 1
      %p99 = por %p97, %p98
      %p100 = scmp.ne.s32.totalorder %s91, %s92
      %p101 = scmp.eq.s32.totalorder %s18, 0
      %p102 = por %p100, %p101
      %p103 = scmp.ne.s32.totalorder %s91, %s92
      %p104 = scmp.eq.s32.totalorder %s19, 1
      %p105 = por %p103, %p104
      %p107 = scmp.ne.s32.totalorder %s92, %s106
      %p108 = scmp.eq.s32.totalorder %s19, 0
      %p109 = por %p107, %p108
      %s110 = ssub.s32 %s13, %s20
      %p111 = scmp.eq.s32.totalorder %s110, 0
      %s113 = sadd.s32 %s112, 1
      %s114 = scalar_select %p111, %s112, %s113
      %p117 = pneg %p111
      %p118 = scmp.eq.s32.totalorder %s13, 1
      %p119 = por %p117, %p118
      %p120 = scmp.ne.s32.totalorder %s112, %s115
      %p121 = scmp.eq.s32.totalorder %s13, 0
      %p122 = por %p120, %p121
      %p123 = scmp.ne.s32.totalorder %s112, %s115
      %p124 = scmp.eq.s32.totalorder %s18, 1
      %p125 = por %p123, %p124
      %p126 = scmp.ne.s32.totalorder %s115, %s116
      %p127 = scmp.eq.s32.totalorder %s18, 0
      %p128 = por %p126, %p127
      %p129 = scmp.ne.s32.totalorder %s115, %s116
      %p130 = scmp.eq.s32.totalorder %s19, 1
      %p131 = por %p129, %p130
      %p133 = scmp.ne.s32.totalorder %s116, %s132
      %p134 = scmp.eq.s32.totalorder %s19, 0
      %p135 = por %p133, %p134
      %p136 = scmp.le.s32.totalorder 1, %s13
      %p137 = scmp.lt.s32.totalorder %s13, 3
      %p138 = pnand %p136, %p137
      %p139 = pneg %p138
      // Predicated region
      $region9: #{tpu_custom_call.1} parent=5 // pred_check
        _
      $region10: #{tpu_custom_call.1} parent=5 // pred_check_branch
        %141 = sbr.rel (%p138) target = $region12
      $region11: #{tpu_custom_call.1} parent=5 // pred_region
        %s142 = ssub.s32 %s13, 1
        // Predicated region
        $region13: #{tpu_custom_call.1} parent=11 // pred_check
          %p143 = pneg %p60
        $region14: #{tpu_custom_call.1} parent=11 // pred_check_branch
          %145 = sbr.rel (%p143) target = $region16
        $region15: #{tpu_custom_call.1} parent=11 // pred_region
          _
        $region16: #{tpu_custom_call.1} parent=11 // pred_fallthru
          _
        // Predicated region
        $region17: #{tpu_custom_call.1} parent=11 // pred_check
          %p146 = pneg %p81
        $region18: #{tpu_custom_call.1} parent=11 // pred_check_branch
          %148 = sbr.rel (%p146) target = $region20
        $region19: #{tpu_custom_call.1} parent=11 // pred_region
          _
        $region20: #{tpu_custom_call.1} parent=11 // pred_fallthru
          _
        // Predicated region
        $region21: #{tpu_custom_call.1} parent=11 // pred_check
          %p149 = pneg %p102
        $region22: #{tpu_custom_call.1} parent=11 // pred_check_branch
          %151 = sbr.rel (%p149) target = $region24
        $region23: #{tpu_custom_call.1} parent=11 // pred_region
          _
        $region24: #{tpu_custom_call.1} parent=11 // pred_fallthru
          _
      $region12: #{tpu_custom_call.1} parent=5 // pred_fallthru
        _
      %p152 = scmp.lt.s32.totalorder %s13, 2
      // Predicated region
      $region25: #{tpu_custom_call.1} parent=5 // pred_check
        %p153 = pneg %p152
      $region26: #{tpu_custom_call.1} parent=5 // pred_check_branch
        %155 = sbr.rel (%p153) target = $region28
      $region27: #{tpu_custom_call.1} parent=5 // pred_region
        // Predicated region
        $region29: #{tpu_custom_call.1} parent=27 // pred_check
          %p156 = pneg %p33
        $region30: #{tpu_custom_call.1} parent=27 // pred_check_branch
          %158 = sbr.rel (%p156) target = $region32
        $region31: #{tpu_custom_call.1} parent=27 // pred_region
          %p159 = scmp.lt.s32.totalorder %s13, 1
          %s160 = scalar_select %p159, %s13, 1
          %s161 = smul.addr %s160, 2
          %s162 = smul.addr %s161, 8
          %s163 = scalar_lea.vmem %s0, %s162
        $region32: #{tpu_custom_call.1} parent=27 // pred_fallthru
          _
      $region28: #{tpu_custom_call.1} parent=5 // pred_fallthru
        _
      %p164 = scmp.le.s32.totalorder 1, %s13
      %p165 = scmp.lt.s32.totalorder %s13, 3
      %p166 = pnand %p164, %p165
      %p167 = pneg %p166
      // Predicated region
      $region33: #{tpu_custom_call.1} parent=5 // pred_check
        _
      $region34: #{tpu_custom_call.1} parent=5 // pred_check_branch
        %169 = sbr.rel (%p166) target = $region36
      $region35: #{tpu_custom_call.1} parent=5 // pred_region
        %s170 = ssub.s32 %s13, 1
        %p171 = scmp.lt.s32.totalorder %s18, 1
        %s172 = scalar_select %p171, %s18, 1
        %s173 = smul.addr %s172, 2
        %s174 = smul.addr %s173, 8
        %s175 = scalar_lea.vmem %s0, %s174
        %p176 = pneg %p39
        %p177 = pneg %p36
        %p178 = pneg %p60
        %p179 = pneg %p57
        %p180 = pneg %p81
        %p181 = pneg %p78
        %p182 = pneg %p102
        %p183 = pneg %p99
        %p184 = pneg %p128
        %p185 = pneg %p125
        %s186 = sand.u32 %s115, 1
        %s187 = scalar_lea.sflag [#allocation3], %s186
        %s188 = sand.u32 %s115, 1
        %s189 = smul.addr %s188, 16
        %s190 = scalar_lea.vmem [#allocation2], %s189
        %p191 = scmp.lt.s32.totalorder %s18, 1
        %s192 = scalar_select %p191, %s18, 1
        %s193 = smul.addr %s192, 2
        %s194 = smul.addr %s193, 8
        %s195 = scalar_lea.vmem %s0, %s194
        %v196 = vld [vmem:[%s195] sm:$0xff]
        %v197 = vld [vmem:[%s195 + $0x8] sm:$0xff]
        %v198 = vld [vmem:[%s1] sm:$0xff]
        %v199 = vld [vmem:[%s1 + $0x8] sm:$0xff]
        %v200 = vld [vmem:[%s1 + $0x10] sm:$0xff]
        %v201 = vld [vmem:[%s1 + $0x18] sm:$0xff]
        %vm202 = vcmask 261120
        %v204 = vsel %vm202, %v196, 0
        %v207 = vsel %vm202, %v197, 0
        %209 = vmatpush.msra.mxu0 0.0
        %210 = vmatpush.msra.mxu0 0.0
        %211 = vmatpush.msra.mxu0 0.0
        %212 = vmatpush.msra.mxu0 0.0
        %213 = vmatpush.msra.mxu0 0.0
        %214 = vmatpush.msra.mxu0 0.0
        %215 = vmatpush.msra.mxu0 0.0
        %216 = vmatpush.msra.mxu0 0.0
        %217 = vmatpush.msra.mxu0 0.0
        %218 = vmatpush.msra.mxu0 0.0
        %219 = vmatpush.msra.mxu0 0.0
        %220 = vmatpush.msra.mxu0 0.0
        %221 = vmatpush.msra.mxu0 %v201
        %222 = vmatpush.msra.mxu0 %v200
        %223 = vmatpush.msra.mxu0 %v199
        %224 = vmatpush.msra.mxu0 %v198
        %225 = vmatmul.f32.gmra.mxu0 %v204
        %v226 = vpop.f32.mrf.mxu0
        %v227 = vadd.f32 0.0, %v226
        %228 = vmatmul.f32.gmra.mxu0 %v207
        %v229 = vpop.f32.mrf.mxu0
        %v230 = vadd.f32 0.0, %v229
        %231 = vdwg.mxu0
        %v232 = vadd.f32 %v227, %v230
        %v233 = vrot.slane %v232, 4
        %v234 = vadd.f32 %v232, %v233
        %v235 = vrot.slane %v234, 2
        %v236 = vadd.f32 %v234, %v235
        %v237 = vrot.slane %v236, 1
        %v238 = vadd.f32 %v236, %v237
        %v239 = vld [vmem:[%s2] sm:$0xff]
        %v240 = vld [vmem:[%s2 + $0x8] sm:$0xff]
        %v241 = vld [vmem:[%s2 + $0x10] sm:$0xff]
        %v242 = vld [vmem:[%s2 + $0x18] sm:$0xff]
        %v243 = vld [vmem:[%s2 + $0x20] sm:$0xff]
        %v244 = vld [vmem:[%s2 + $0x28] sm:$0xff]
        %v245 = vld [vmem:[%s2 + $0x30] sm:$0xff]
        %v246 = vld [vmem:[%s2 + $0x38] sm:$0xff]
        %v247 = vld [vmem:[%s2 + $0x40] sm:$0xff]
        %v248 = vld [vmem:[%s2 + $0x48] sm:$0xff]
        %v249 = vld [vmem:[%s2 + $0x50] sm:$0xff]
        %v250 = vld [vmem:[%s2 + $0x58] sm:$0xff]
        %v251 = vld [vmem:[%s2 + $0x60] sm:$0xff]
        %v252 = vld [vmem:[%s2 + $0x68] sm:$0xff]
        %v253 = vld [vmem:[%s2 + $0x70] sm:$0xff]
        %v254 = vld [vmem:[%s2 + $0x78] sm:$0xff]
        %255 = vmatpush.msra.mxu0 %v254
        %256 = vmatpush.msra.mxu0 %v253
        %257 = vmatpush.msra.mxu0 %v252
        %258 = vmatpush.msra.mxu0 %v251
        %259 = vmatpush.msra.mxu0 %v250
        %260 = vmatpush.msra.mxu0 %v249
        %261 = vmatpush.msra.mxu0 %v248
        %262 = vmatpush.msra.mxu0 %v247
        %263 = vmatpush.msra.mxu0 %v246
        %264 = vmatpush.msra.mxu0 %v245
        %265 = vmatpush.msra.mxu0 %v244
        %266 = vmatpush.msra.mxu0 %v243
        %267 = vmatpush.msra.mxu0 %v242
        %268 = vmatpush.msra.mxu0 %v241
        %269 = vmatpush.msra.mxu0 %v240
        %270 = vmatpush.msra.mxu0 %v239
        %271 = vmatmul.f32.gmra.mxu0 %v238
        %v272 = vpop.f32.mrf.mxu0
        %v273 = vadd.f32 0.0, %v272
        %274 = vdwg.mxu0
        %v275 = vmul.f32 %v273, 0.001953125
        %v276 = vld [vmem:[%s3] sm:$0xf]
        %vm277 = vcmask 31744
        %v279 = vsel %vm277, %v275, 0
        %vm281 = vcmask 1043456
        %v283 = vsel %vm281, %v276, 0
        %285 = vmatpush.msra.mxu0 0.0
        %286 = vmatpush.msra.mxu0 0.0
        %287 = vmatpush.msra.mxu0 0.0
        %288 = vmatpush.msra.mxu0 0.0
        %289 = vmatpush.msra.mxu0 0.0
        %290 = vmatpush.msra.mxu0 0.0
        %291 = vmatpush.msra.mxu0 0.0
        %292 = vmatpush.msra.mxu0 0.0
        %293 = vmatpush.msra.mxu0 0.0
        %294 = vmatpush.msra.mxu0 0.0
        %295 = vmatpush.msra.mxu0 0.0
        %296 = vmatpush.msra.mxu0 0.0
        %297 = vmatpush.msra.mxu0 0.0
        %298 = vmatpush.msra.mxu0 0.0
        %299 = vmatpush.msra.mxu0 0.0
        %300 = vmatpush.msra.mxu0 %v283
        %301 = vmatmul.f32.gmra.mxu0 %v279
        %v302 = vpop.f32.mrf.mxu0
        %v303 = vadd.f32 0.0, %v302
        %304 = vdwg.mxu0
        %v305 = vperm.slane %v303, 0
        %v306 = vsub.f32 %v227, %v305
        %v307 = vsub.f32 %v230, %v305
        %v308 = vmul.f32 %v306, %v306
        %v309 = vmul.f32 %v307, %v307
        %v310 = vadd.f32 %v308, %v309
        %v311 = vrot.slane %v310, 4
        %v312 = vadd.f32 %v310, %v311
        %v313 = vrot.slane %v312, 2
        %v314 = vadd.f32 %v312, %v313
        %v315 = vrot.slane %v314, 1
        %v316 = vadd.f32 %v314, %v315
        %317 = vmatpush.msra.mxu0 %v254
        %318 = vmatpush.msra.mxu0 %v253
        %319 = vmatpush.msra.mxu0 %v252
        %320 = vmatpush.msra.mxu0 %v251
        %321 = vmatpush.msra.mxu0 %v250
        %322 = vmatpush.msra.mxu0 %v249
        %323 = vmatpush.msra.mxu0 %v248
        %324 = vmatpush.msra.mxu0 %v247
        %325 = vmatpush.msra.mxu0 %v246
        %326 = vmatpush.msra.mxu0 %v245
        %327 = vmatpush.msra.mxu0 %v244
        %328 = vmatpush.msra.mxu0 %v243
        %329 = vmatpush.msra.mxu0 %v242
        %330 = vmatpush.msra.mxu0 %v241
        %331 = vmatpush.msra.mxu0 %v240
        %332 = vmatpush.msra.mxu0 %v239
        %333 = vmatmul.f32.gmra.mxu0 %v316
        %v334 = vpop.f32.mrf.mxu0
        %v335 = vadd.f32 0.0, %v334
        %336 = vdwg.mxu0
        %v337 = vmul.f32 %v335, 0.001953125
        %v338 = vadd.f32 %v337, 1e-05
        %v339 = vrsqrt.pop %v338
        %v340 = vmul.f32 %v339, %v338
        %v341 = vmul.f32 %v340, %v339
        %v342 = vmul.f32 0.5, %v341
        %v343 = vsub.f32 1.5, %v342
        %v344 = vmul.f32 %v339, %v343
        %vm345 = vweird.f32 %v338
        %vm346 = vweird.f32 %v339
        %vm347 = vmor %vm345, %vm346
        %v348 = vsel %vm347, %v339, %v344
        %v350 = vsel %vm277, %v348, 0
        %352 = vmatpush.msra.mxu0 0.0
        %353 = vmatpush.msra.mxu0 0.0
        %354 = vmatpush.msra.mxu0 0.0
        %355 = vmatpush.msra.mxu0 0.0
        %356 = vmatpush.msra.mxu0 0.0
        %357 = vmatpush.msra.mxu0 0.0
        %358 = vmatpush.msra.mxu0 0.0
        %359 = vmatpush.msra.mxu0 0.0
        %360 = vmatpush.msra.mxu0 0.0
        %361 = vmatpush.msra.mxu0 0.0
        %362 = vmatpush.msra.mxu0 0.0
        %363 = vmatpush.msra.mxu0 0.0
        %364 = vmatpush.msra.mxu0 0.0
        %365 = vmatpush.msra.mxu0 0.0
        %366 = vmatpush.msra.mxu0 0.0
        %367 = vmatpush.msra.mxu0 %v283
        %368 = vmatmul.f32.gmra.mxu0 %v350
        %v369 = vpop.f32.mrf.mxu0
        %v370 = vadd.f32 0.0, %v369
        %371 = vdwg.mxu0
        %v372 = vperm.slane %v370, 0
        %v373 = vmul.f32 %v306, %v372
        %v374 = vmul.f32 %v307, %v372
        %v375 = vmax.f32 %v373, 0.0
        %v376 = vmax.f32 %v374, 0.0
        %377 = vst [vmem:[%s190] sm:$0xff] %v375
        %378 = vst [vmem:[%s190 + $0x8] sm:$0xff] %v376
        %s379 = sand.u32 %s115, 1
        %s380 = scalar_lea.sflag [#allocation3], %s379
        %s381 = sand.u32 %s115, 1
        %s382 = smul.addr %s381, 16
        %s383 = scalar_lea.vmem [#allocation2], %s382
        // Predicated region
        $region37: #{tpu_custom_call.1} parent=35 // pred_check
          %p384 = pneg %p125
        $region38: #{tpu_custom_call.1} parent=35 // pred_check_branch
          %386 = sbr.rel (%p384) target = $region40
        $region39: #{tpu_custom_call.1} parent=35 // pred_region
          %388 = vsyncadd %s380, 0
          %s389 = smul.addr %s18, 2
          %s390 = smul.addr %s389, 8
          %s391 = scalar_lea.hbm %s4, %s390
          %s392 = sshll.u32 %s383, 4
          %s393 = int_to_ptr.vmem [resolvable:$true] %s392
          %s394 = sshll.u32 %s391, 4
          %s395 = int_to_ptr.hbm [resolvable:$true] %s394
          %400 = dma.vmem_to_hbm [thread:$0]  %s393, 256, %s395, %s380, 128, 128, 8
        $region40: #{tpu_custom_call.1} parent=35 // pred_fallthru
          _
      $region36: #{tpu_custom_call.1} parent=5 // pred_fallthru
        _
      %p401 = scmp.le.s32.totalorder 2, %s13
      // Predicated region
      $region41: #{tpu_custom_call.1} parent=5 // pred_check
        %p402 = pneg %p401
      $region42: #{tpu_custom_call.1} parent=5 // pred_check_branch
        %404 = sbr.rel (%p402) target = $region44
      $region43: #{tpu_custom_call.1} parent=5 // pred_region
        %s405 = ssub.s32 %s13, 2
        // Predicated region
        $region45: #{tpu_custom_call.1} parent=43 // pred_check
          %p406 = pneg %p131
        $region46: #{tpu_custom_call.1} parent=43 // pred_check_branch
          %408 = sbr.rel (%p406) target = $region48
        $region47: #{tpu_custom_call.1} parent=43 // pred_region
          %s409 = sand.u32 %s116, 1
          %s410 = scalar_lea.sflag [#allocation3], %s409
          %s411 = sand.u32 %s116, 1
          %s412 = smul.addr %s411, 16
          %s413 = scalar_lea.vmem [#allocation2], %s412
          %415 = dma.done %s410, 256
        $region48: #{tpu_custom_call.1} parent=43 // pred_fallthru
          _
      $region44: #{tpu_custom_call.1} parent=5 // pred_fallthru
        _
    $region6: #{tpu_custom_call.1} parent=1 // loop_footer
      %s17 = sadd.s32 1, %s13
    $region7: #{tpu_custom_call.1} parent=1 // loop_footer_branch
      %12 = sbr.rel target = $region3
    $region8: #{tpu_custom_call.1} parent=1 // loop_exit
      _
    %416 = vsyncpa [#allocation3], 1
    %s417 = scalar_lea.sflag [#allocation3], 1
    %418 = vsyncpa %s417, 1

</llo_original>
